<compile_context>
chip_gen: v7x
topology: tpu7x:2x2x1
jax: 0.10.0
libtpu: 0.0.40
codegen_flags: <defaults>
</compile_context>

<pallas_src>
import functools

import jax
import jax.numpy as jnp
from jax.experimental import pallas as pl
from jax.experimental.pallas import tpu as pltpu

EPSILON = 1e-5
_LANES = 128
_VMEM_LIMIT = 48 * 1024 * 1024          # fits v7x (64 MiB phys), v5e/v6e (128 MiB)
_STEP_BYTES_TARGET = 8 << 20            # ~8 MiB of input per grid step


def _pick_rows(n128, bytes_per_row):
    """Rows-of-128-lanes per block, dtype-aware, multiple of 32 (dense sublanes
    for f32/bf16/int8), targeting ~_STEP_BYTES_TARGET input bytes per step."""
    r = _STEP_BYTES_TARGET // max(1, bytes_per_row)
    r = max(32, (r // 32) * 32)
    return n128 if n128 <= r else r


def _sanitize_rows(rows, n128):
    rows = max(1, min(int(rows), n128))
    if rows < n128:
        rows = max(8, (rows // 8) * 8)   # (8,128) tiling constraint
    return rows


def _gdl_kernel(x_ref, t_ref, t_acc, u_acc, ut_acc, *,
                n_tiles, tiles_per_slice, rows_last, labels_mode,
                has_phantom, has_ragged):
    j = pl.program_id(2)
    gt = pl.program_id(0) * tiles_per_slice + j        # global tile index

    @pl.when(j == 0)
    def _():
        t_acc[...] = jnp.zeros_like(t_acc)
        u_acc[...] = jnp.zeros_like(u_acc)
        ut_acc[...] = jnp.zeros_like(ut_acc)

    def accumulate(mask_rows):
        x = x_ref[...].astype(jnp.float32)             # (C, R, 128)
        u = jnp.tanh(0.5 * x)                          # sigmoid(x) = 0.5*u + 0.5
        if labels_mode:
            lab = t_ref[...]                           # (R, 128) int32 labels
            cls = jax.lax.broadcasted_iota(jnp.int32, x.shape, 0)
            t = (lab[None, :, :] == cls).astype(jnp.float32)
        else:
            t = t_ref[...].astype(jnp.float32)         # (C, R, 128)
        if mask_rows:
            # Last tile only: rows past the end of the array hold unspecified
            # VMEM padding (possibly NaN) — zero them before accumulating.
            row = jax.lax.broadcasted_iota(jnp.int32, x.shape, 1)
            valid = row < rows_last
            u = jnp.where(valid, u, 0.0)
            t = jnp.where(valid, t, 0.0)
        t_acc[...] += jnp.sum(t, axis=1)               # lane-wise (C, 128) sums
        u_acc[...] += jnp.sum(u, axis=1)
        ut_acc[...] += jnp.sum(u * t, axis=1)

    if not (has_ragged or has_phantom):
        accumulate(False)
    else:
        last = n_tiles - 1

        @pl.when(gt < last)
        def _():
            accumulate(False)

        @pl.when(gt == last)
        def _():
            accumulate(has_ragged)
        # gt > last: phantom tile on the second parallel slice — no work.


def _gdl_partial_sums(x4, t4, labels_mode, rows):
    """x4: (N, C, n128, 128); t4: dense (N, C, n128, 128) or labels (N, n128, 128).
    Returns per-class (sum(t), sum(tanh(0.5*x)), sum(tanh(0.5*x)*t))."""
    N, C, n128, _ = x4.shape
    n_tiles = pl.cdiv(n128, rows)
    P = 2 if n_tiles >= 2 else 1                       # megacore tile-axis split
    T = pl.cdiv(n_tiles, P)
    has_phantom = P * T > n_tiles
    has_ragged = (n128 % rows) != 0
    rows_last = n128 - (n_tiles - 1) * rows

    def tile_idx(pi, j):
        gt = pi * T + j
        if has_phantom:
            gt = jnp.minimum(gt, n_tiles - 1)          # keep the phantom DMA in bounds
        return gt

    x_spec = pl.BlockSpec((None, C, rows, _LANES),
                          lambda pi, n, j: (n, 0, tile_idx(pi, j), 0))
    if labels_mode:
        t_spec = pl.BlockSpec((None, rows, _LANES),
                              lambda pi, n, j: (n, tile_idx(pi, j), 0))
    else:
        t_spec = pl.BlockSpec((None, C, rows, _LANES),
                              lambda pi, n, j: (n, 0, tile_idx(pi, j), 0))
    acc_spec = pl.BlockSpec((None, None, C, _LANES), lambda pi, n, j: (pi, n, 0, 0))
    acc_shape = jax.ShapeDtypeStruct((P, N, C, _LANES), jnp.float32)

    kernel = functools.partial(
        _gdl_kernel, n_tiles=n_tiles, tiles_per_slice=T, rows_last=rows_last,
        labels_mode=labels_mode, has_phantom=has_phantom, has_ragged=has_ragged)

    t_acc, u_acc, ut_acc = pl.pallas_call(
        kernel,
        out_shape=(acc_shape, acc_shape, acc_shape),
        grid_spec=pltpu.PrefetchScalarGridSpec(
            num_scalar_prefetch=0,
            grid=(P, N, T),
            in_specs=[x_spec, t_spec],
            out_specs=[acc_spec, acc_spec, acc_spec],
        ),
        compiler_params=pltpu.CompilerParams(
            dimension_semantics=("parallel", "parallel", "arbitrary"),
            vmem_limit_bytes=_VMEM_LIMIT,
        ),
    )(x4, t4)

    tsum = jnp.sum(t_acc, axis=(0, 1, 3))              # (C,)
    usum = jnp.sum(u_acc, axis=(0, 1, 3))
    utsum = jnp.sum(ut_acc, axis=(0, 1, 3))
    return tsum, usum, utsum


def _finalize(tsum, usum, utsum, count):
    psum = 0.5 * usum + 0.5 * count                    # sum(sigmoid(x)) per class
    isect = 0.5 * utsum + 0.5 * tsum                   # sum(sigmoid(x)*t) per class
    class_weights = 1.0 / jnp.maximum(tsum * tsum, EPSILON)
    intersect = jnp.sum(isect * class_weights)
    denominator = jnp.sum((psum + tsum) * class_weights)
    return 1.0 - 2.0 * intersect / jnp.maximum(denominator, EPSILON)


@functools.partial(jax.jit, static_argnames=("rows",))
def generalized_dice_loss(x, target, rows=None):
    """x, target: (N, C, *spatial) arrays (any float/int dtype). Scalar f32 loss."""
    assert x.shape == target.shape, "'input' and 'target' must have the same shape"
    N, C = x.shape[0], x.shape[1]
    HW = 1
    for d in x.shape[2:]:
        HW *= d

    x3 = x.reshape(N, C, HW)
    t3 = target.reshape(N, C, HW)
    n128 = pl.cdiv(HW, _LANES)
    HWp = n128 * _LANES
    if HWp != HW:
        # One-time zero-pad (ragged spatial sizes only): zero-padded x adds
        # tanh(0)=0 and zero-padded target adds 0 to every accumulated sum,
        # and the true element count N*HW is used in the finalize.
        x3 = jnp.pad(x3, ((0, 0), (0, 0), (0, HWp - HW)))
        t3 = jnp.pad(t3, ((0, 0), (0, 0), (0, HWp - HW)))
    x4 = x3.reshape(N, C, n128, _LANES)
    t4 = t3.reshape(N, C, n128, _LANES)

    if rows is None:
        bytes_per_row = _LANES * C * (x.dtype.itemsize + target.dtype.itemsize)
        rows = _pick_rows(n128, bytes_per_row)
    else:
        rows = _sanitize_rows(rows, n128)

    tsum, usum, utsum = _gdl_partial_sums(x4, t4, False, rows)
    return _finalize(tsum, usum, utsum, float(N * HW))


@functools.partial(jax.jit, static_argnames=("rows",))
def generalized_dice_loss_from_labels(x, labels, rows=None):
    """Same loss as generalized_dice_loss(x, one_hot(labels, C, axis=1)) but
    streams integer labels of shape (N, *spatial); the one-hot comparison is
    built in-kernel, roughly halving HBM traffic for the common use case."""
    N, C = x.shape[0], x.shape[1]
    assert labels.shape == (x.shape[0],) + x.shape[2:], \
        "'labels' must have shape (N, *spatial)"
    HW = 1
    for d in x.shape[2:]:
        HW *= d

    x3 = x.reshape(N, C, HW)
    l2 = labels.reshape(N, HW).astype(jnp.int32)
    n128 = pl.cdiv(HW, _LANES)
    HWp = n128 * _LANES
    if HWp != HW:
        x3 = jnp.pad(x3, ((0, 0), (0, 0), (0, HWp - HW)))
        l2 = jnp.pad(l2, ((0, 0), (0, HWp - HW)), constant_values=-1)  # never matches
    x4 = x3.reshape(N, C, n128, _LANES)
    l3 = l2.reshape(N, n128, _LANES)

    if rows is None:
        bytes_per_row = _LANES * (C * x.dtype.itemsize + 4)
        rows = _pick_rows(n128, bytes_per_row)
    else:
        rows = _sanitize_rows(rows, n128)

    tsum, usum, utsum = _gdl_partial_sums(x4, l3, True, rows)
    return _finalize(tsum, usum, utsum, float(N * HW))


def _reference_loss(x, target):
    """Pure-JAX reference (mirrors the PyTorch module)."""
    C = x.shape[1]
    perm = (1, 0) + tuple(range(2, x.ndim))
    p = jax.nn.sigmoid(jnp.transpose(x, perm).reshape(C, -1).astype(jnp.float32))
    t = jnp.transpose(target, perm).reshape(C, -1).astype(jnp.float32)
    tsum = t.sum(-1)
    cw = 1.0 / jnp.maximum(tsum * tsum, EPSILON)
    intersect = ((p * t).sum(-1) * cw).sum()
    denom = ((p + t).sum(-1) * cw).sum()
    return 1.0 - 2.0 * intersect / jnp.maximum(denom, EPSILON)


if __name__ == "__main__":
    key = jax.random.PRNGKey(0)
    k1, k2, k3, k4, k5, k6 = jax.random.split(key, 6)

    # Test 1: module-consistent small shape (single tile, P=1), dense + labels.
    N, C, H, W = 2, 4, 16, 16
    x = jax.random.normal(k1, (N, C, H, W), dtype=jnp.float32)
    labels = jax.random.randint(k2, (N, H, W), 0, C)
    target = jax.nn.one_hot(labels, C, axis=1, dtype=jnp.float32)

    ref = _reference_loss(x, target)
    loss = jax.block_until_ready(generalized_dice_loss(x, target))
    assert jnp.allclose(loss, ref, rtol=1e-4, atol=1e-5), (loss, ref)
    loss_lab = jax.block_until_ready(generalized_dice_loss_from_labels(x, labels))
    assert jnp.allclose(loss_lab, ref, rtol=1e-4, atol=1e-5), (loss_lab, ref)

    # Test 2: multi-tile grid with megacore split (P=2), ragged last tile and a
    # phantom tile on the second parallel slice (n128=17, rows=8 -> 3 tiles).
    N2, C2, H2, W2 = 1, 3, 32, 68
    x2 = jax.random.normal(k3, (N2, C2, H2, W2), dtype=jnp.float32)
    labels2 = jax.random.randint(k4, (N2, H2, W2), 0, C2)
    target2 = jax.nn.one_hot(labels2, C2, axis=1, dtype=jnp.float32)

    ref2 = _reference_loss(x2, target2)
    loss2 = jax.block_until_ready(generalized_dice_loss(x2, target2, rows=8))
    assert jnp.allclose(loss2, ref2, rtol=1e-4, atol=1e-5), (loss2, ref2)
    loss2_lab = jax.block_until_ready(
        generalized_dice_loss_from_labels(x2, labels2, rows=8))
    assert jnp.allclose(loss2_lab, ref2, rtol=1e-4, atol=1e-5), (loss2_lab, ref2)

    # Test 3: ragged spatial size (HW % 128 != 0) with bf16 logits.
    N3, C3, H3, W3 = 2, 3, 10, 13
    x3_in = jax.random.normal(k5, (N3, C3, H3, W3), dtype=jnp.bfloat16)
    labels3 = jax.random.randint(k6, (N3, H3, W3), 0, C3)
    target3 = jax.nn.one_hot(labels3, C3, axis=1, dtype=jnp.float32)

    ref3 = _reference_loss(x3_in, target3)
    loss3 = jax.block_until_ready(generalized_dice_loss(x3_in, target3))
    assert jnp.allclose(loss3, ref3, rtol=1e-3, atol=1e-4), (loss3, ref3)

    print("KERNEL_OK")
</pallas_src>

<mosaic_0001>
module attributes {stable_mosaic.version = 11 : i64} {
  func.func @_gdl_kernel(%arg0: i32, %arg1: i32, %arg2: i32, %arg3: memref<1x4x2x128xf32, #tpu.memory_space<vmem>>, %arg4: memref<1x4x2x128xf32, #tpu.memory_space<vmem>>, %arg5: memref<1x1x4x128xf32, #tpu.memory_space<vmem>>, %arg6: memref<1x1x4x128xf32, #tpu.memory_space<vmem>>, %arg7: memref<1x1x4x128xf32, #tpu.memory_space<vmem>>) attributes {dimension_semantics = [#tpu.dimension_semantics<parallel>, #tpu.dimension_semantics<parallel>, #tpu.dimension_semantics<arbitrary>], iteration_bounds = array<i64: 1, 2, 1>, scalar_prefetch = 0 : i64, scratch_operands = 0 : i64, tpu.core_type = #tpu.core_type<tc>, window_params = [{transform_indices = @transform_0, window_bounds = array<i64: 1, 4, 2, 128>}, {transform_indices = @transform_1, window_bounds = array<i64: 1, 4, 2, 128>}, {transform_indices = @transform_2, window_bounds = array<i64: 1, 1, 4, 128>}, {transform_indices = @transform_3, window_bounds = array<i64: 1, 1, 4, 128>}, {transform_indices = @transform_4, window_bounds = array<i64: 1, 1, 4, 128>}]} {
    %c0_i32 = arith.constant 0 : i32
    %0 = arith.cmpi eq, %arg2, %c0_i32 : i32
    %1 = arith.extui %0 : i1 to i32
    %c0_i32_0 = arith.constant 0 : i32
    %2 = arith.cmpi ne, %1, %c0_i32_0 : i32
    scf.if %2 {
      %cst_35 = arith.constant 0.000000e+00 : f32
      %32 = vector.broadcast %cst_35 : f32 to vector<4x128xf32>
      %c0_36 = arith.constant 0 : index
      %c0_37 = arith.constant 0 : index
      %c0_38 = arith.constant 0 : index
      %c0_39 = arith.constant 0 : index
      %33 = vector.load %arg5[%c0_36, %c0_37, %c0_38, %c0_39] : memref<1x1x4x128xf32, #tpu.memory_space<vmem>>, vector<1x1x4x128xf32>
      %34 = vector.shape_cast %33 : vector<1x1x4x128xf32> to vector<4x128xf32>
      %35 = vector.shape_cast %32 : vector<4x128xf32> to vector<1x1x4x128xf32>
      tpu.vector_store %arg5[%c0_36, %c0_37, %c0_38, %c0_39], %35 {strides = array<i32>} : memref<1x1x4x128xf32, #tpu.memory_space<vmem>>, vector<1x1x4x128xf32>,
      %cst_40 = arith.constant 0.000000e+00 : f32
      %36 = vector.broadcast %cst_40 : f32 to vector<4x128xf32>
      %c0_41 = arith.constant 0 : index
      %c0_42 = arith.constant 0 : index
      %c0_43 = arith.constant 0 : index
      %c0_44 = arith.constant 0 : index
      %37 = vector.load %arg6[%c0_41, %c0_42, %c0_43, %c0_44] : memref<1x1x4x128xf32, #tpu.memory_space<vmem>>, vector<1x1x4x128xf32>
      %38 = vector.shape_cast %37 : vector<1x1x4x128xf32> to vector<4x128xf32>
      %39 = vector.shape_cast %36 : vector<4x128xf32> to vector<1x1x4x128xf32>
      tpu.vector_store %arg6[%c0_41, %c0_42, %c0_43, %c0_44], %39 {strides = array<i32>} : memref<1x1x4x128xf32, #tpu.memory_space<vmem>>, vector<1x1x4x128xf32>,
      %cst_45 = arith.constant 0.000000e+00 : f32
      %40 = vector.broadcast %cst_45 : f32 to vector<4x128xf32>
      %c0_46 = arith.constant 0 : index
      %c0_47 = arith.constant 0 : index
      %c0_48 = arith.constant 0 : index
      %c0_49 = arith.constant 0 : index
      %41 = vector.load %arg7[%c0_46, %c0_47, %c0_48, %c0_49] : memref<1x1x4x128xf32, #tpu.memory_space<vmem>>, vector<1x1x4x128xf32>
      %42 = vector.shape_cast %41 : vector<1x1x4x128xf32> to vector<4x128xf32>
      %43 = vector.shape_cast %40 : vector<4x128xf32> to vector<1x1x4x128xf32>
      tpu.vector_store %arg7[%c0_46, %c0_47, %c0_48, %c0_49], %43 {strides = array<i32>} : memref<1x1x4x128xf32, #tpu.memory_space<vmem>>, vector<1x1x4x128xf32>,
    } else {
    }
    %c0 = arith.constant 0 : index
    %c0_1 = arith.constant 0 : index
    %c0_2 = arith.constant 0 : index
    %c0_3 = arith.constant 0 : index
    %3 = vector.load %arg3[%c0, %c0_1, %c0_2, %c0_3] : memref<1x4x2x128xf32, #tpu.memory_space<vmem>>, vector<1x4x2x128xf32>
    %4 = vector.shape_cast %3 : vector<1x4x2x128xf32> to vector<4x2x128xf32>
    %cst = arith.constant 5.000000e-01 : f32
    %5 = vector.broadcast %cst : f32 to vector<4x2x128xf32>
    %6 = arith.mulf %5, %4 : vector<4x2x128xf32>
    %7 = math.tanh %6 : vector<4x2x128xf32>
    %c0_4 = arith.constant 0 : index
    %c0_5 = arith.constant 0 : index
    %c0_6 = arith.constant 0 : index
    %c0_7 = arith.constant 0 : index
    %8 = vector.load %arg4[%c0_4, %c0_5, %c0_6, %c0_7] : memref<1x4x2x128xf32, #tpu.memory_space<vmem>>, vector<1x4x2x128xf32>
    %9 = vector.shape_cast %8 : vector<1x4x2x128xf32> to vector<4x2x128xf32>
    %c0_8 = arith.constant 0 : index
    %c0_9 = arith.constant 0 : index
    %c0_10 = arith.constant 0 : index
    %c0_11 = arith.constant 0 : index
    %10 = vector.load %arg5[%c0_8, %c0_9, %c0_10, %c0_11] : memref<1x1x4x128xf32, #tpu.memory_space<vmem>>, vector<1x1x4x128xf32>
    %11 = vector.shape_cast %10 : vector<1x1x4x128xf32> to vector<4x128xf32>
    %cst_12 = arith.constant dense<0.000000e+00> : vector<4x128xf32>
    %12 = vector.multi_reduction <add>, %9, %cst_12 [1] : vector<4x2x128xf32> to vector<4x128xf32>
    %13 = arith.addf %11, %12 : vector<4x128xf32>
    %c0_13 = arith.constant 0 : index
    %c0_14 = arith.constant 0 : index
    %c0_15 = arith.constant 0 : index
    %c0_16 = arith.constant 0 : index
    %14 = vector.load %arg5[%c0_13, %c0_14, %c0_15, %c0_16] : memref<1x1x4x128xf32, #tpu.memory_space<vmem>>, vector<1x1x4x128xf32>
    %15 = vector.shape_cast %14 : vector<1x1x4x128xf32> to vector<4x128xf32>
    %16 = vector.shape_cast %13 : vector<4x128xf32> to vector<1x1x4x128xf32>
    tpu.vector_store %arg5[%c0_13, %c0_14, %c0_15, %c0_16], %16 {strides = array<i32>} : memref<1x1x4x128xf32, #tpu.memory_space<vmem>>, vector<1x1x4x128xf32>,
    %c0_17 = arith.constant 0 : index
    %c0_18 = arith.constant 0 : index
    %c0_19 = arith.constant 0 : index
    %c0_20 = arith.constant 0 : index
    %17 = vector.load %arg6[%c0_17, %c0_18, %c0_19, %c0_20] : memref<1x1x4x128xf32, #tpu.memory_space<vmem>>, vector<1x1x4x128xf32>
    %18 = vector.shape_cast %17 : vector<1x1x4x128xf32> to vector<4x128xf32>
    %cst_21 = arith.constant dense<0.000000e+00> : vector<4x128xf32>
    %19 = vector.multi_reduction <add>, %7, %cst_21 [1] : vector<4x2x128xf32> to vector<4x128xf32>
    %20 = arith.addf %18, %19 : vector<4x128xf32>
    %c0_22 = arith.constant 0 : index
    %c0_23 = arith.constant 0 : index
    %c0_24 = arith.constant 0 : index
    %c0_25 = arith.constant 0 : index
    %21 = vector.load %arg6[%c0_22, %c0_23, %c0_24, %c0_25] : memref<1x1x4x128xf32, #tpu.memory_space<vmem>>, vector<1x1x4x128xf32>
    %22 = vector.shape_cast %21 : vector<1x1x4x128xf32> to vector<4x128xf32>
    %23 = vector.shape_cast %20 : vector<4x128xf32> to vector<1x1x4x128xf32>
    tpu.vector_store %arg6[%c0_22, %c0_23, %c0_24, %c0_25], %23 {strides = array<i32>} : memref<1x1x4x128xf32, #tpu.memory_space<vmem>>, vector<1x1x4x128xf32>,
    %c0_26 = arith.constant 0 : index
    %c0_27 = arith.constant 0 : index
    %c0_28 = arith.constant 0 : index
    %c0_29 = arith.constant 0 : index
    %24 = vector.load %arg7[%c0_26, %c0_27, %c0_28, %c0_29] : memref<1x1x4x128xf32, #tpu.memory_space<vmem>>, vector<1x1x4x128xf32>
    %25 = vector.shape_cast %24 : vector<1x1x4x128xf32> to vector<4x128xf32>
    %26 = arith.mulf %7, %9 : vector<4x2x128xf32>
    %cst_30 = arith.constant dense<0.000000e+00> : vector<4x128xf32>
    %27 = vector.multi_reduction <add>, %26, %cst_30 [1] : vector<4x2x128xf32> to vector<4x128xf32>
    %28 = arith.addf %25, %27 : vector<4x128xf32>
    %c0_31 = arith.constant 0 : index
    %c0_32 = arith.constant 0 : index
    %c0_33 = arith.constant 0 : index
    %c0_34 = arith.constant 0 : index
    %29 = vector.load %arg7[%c0_31, %c0_32, %c0_33, %c0_34] : memref<1x1x4x128xf32, #tpu.memory_space<vmem>>, vector<1x1x4x128xf32>
    %30 = vector.shape_cast %29 : vector<1x1x4x128xf32> to vector<4x128xf32>
    %31 = vector.shape_cast %28 : vector<4x128xf32> to vector<1x1x4x128xf32>
    tpu.vector_store %arg7[%c0_31, %c0_32, %c0_33, %c0_34], %31 {strides = array<i32>} : memref<1x1x4x128xf32, #tpu.memory_space<vmem>>, vector<1x1x4x128xf32>,
    return
  }
  func.func @transform_0(%arg0: i32, %arg1: i32, %arg2: i32) -> (i32, i32, i32, i32) {
    %c1_i32 = arith.constant 1 : i32
    %0 = arith.muli %arg0, %c1_i32 : i32
    %1 = arith.addi %0, %arg2 : i32
    %c0_i32 = arith.constant 0 : i32
    %c0_i32_0 = arith.constant 0 : i32
    %c0_i32_1 = arith.constant 0 : i32
    return %arg1, %c0_i32, %1, %c0_i32_0 : i32, i32, i32, i32
  }
  func.func @transform_1(%arg0: i32, %arg1: i32, %arg2: i32) -> (i32, i32, i32, i32) {
    %c1_i32 = arith.constant 1 : i32
    %0 = arith.muli %arg0, %c1_i32 : i32
    %1 = arith.addi %0, %arg2 : i32
    %c0_i32 = arith.constant 0 : i32
    %c0_i32_0 = arith.constant 0 : i32
    %c0_i32_1 = arith.constant 0 : i32
    return %arg1, %c0_i32, %1, %c0_i32_0 : i32, i32, i32, i32
  }
  func.func @transform_2(%arg0: i32, %arg1: i32, %arg2: i32) -> (i32, i32, i32, i32) {
    %c0_i32 = arith.constant 0 : i32
    %c0_i32_0 = arith.constant 0 : i32
    %c0_i32_1 = arith.constant 0 : i32
    return %arg0, %arg1, %c0_i32, %c0_i32_0 : i32, i32, i32, i32
  }
  func.func @transform_3(%arg0: i32, %arg1: i32, %arg2: i32) -> (i32, i32, i32, i32) {
    %c0_i32 = arith.constant 0 : i32
    %c0_i32_0 = arith.constant 0 : i32
    %c0_i32_1 = arith.constant 0 : i32
    return %arg0, %arg1, %c0_i32, %c0_i32_0 : i32, i32, i32, i32
  }
  func.func @transform_4(%arg0: i32, %arg1: i32, %arg2: i32) -> (i32, i32, i32, i32) {
    %c0_i32 = arith.constant 0 : i32
    %c0_i32_0 = arith.constant 0 : i32
    %c0_i32_1 = arith.constant 0 : i32
    return %arg0, %arg1, %c0_i32, %c0_i32_0 : i32, i32, i32, i32
  }
}

</mosaic_0001>

<llo_original>
// kernel: generalized_dice_loss.1
$region0: #{generalized_dice_loss.1}
  #allocation0 [shape = 'u32[]', space=smem, size = 0x4, offset = 0x4, fixed_abs, tag = 'smem constant byte address 0x4 - core index']
  #allocation1 [shape = 'u32[144,128]{1,0:T(1,128)}', space=vmem, size = 0x12000, scoped, tag = 'internal scratch']
  %s0 = inlined_call_operand.vmem [shape: f32[2,4,2,128], index: 0, kind: input, shape index: {}]
  %s1 = inlined_call_operand.vmem [shape: f32[2,4,2,128], index: 1, kind: input, shape index: {}]
  %s2 = inlined_call_operand.vmem [shape: f32[1,2,4,128], index: 2, kind: output, shape index: {0}]
  %s3 = inlined_call_operand.vmem [shape: f32[1,2,4,128], index: 3, kind: output, shape index: {1}]
  %s4 = inlined_call_operand.vmem [shape: f32[1,2,4,128], index: 4, kind: output, shape index: {2}]
  %5 = xla_tuple %s2, %s3, %s4
  %s6 = sld [smem:[#allocation0]]
  $region61: #{generalized_dice_loss.1} parent=0
    _
  %s8 = ssub.s32 1, %s6
  %s9 = scalar_select 0, %s8, %s6
  loop: start=0, step=1, limit=4
  $region2: #{generalized_dice_loss.1} parent=0 // loop_pre_header
    _
  $region3: #{generalized_dice_loss.1} parent=0 // loop_header
    %s11 = sphi 0, %s15
    %p12 = scmp.ge.s32.totalorder %s11, 4
    %s18 = sphi 0, %s37
    %s19 = sphi 0, %s33
    %s20 = sphi 0, %s29
    %s21 = sphi 0, %s18
    %s22 = sphi 0, %s19
    %s23 = sphi 0, %s20
    %s24 = sphi 0, %s21
    %s25 = sphi 0, %s22
    %s26 = sphi 0, %s23
    %s44 = sphi 0, %s46
    %s47 = sphi 0, %s44
    %s48 = sphi 0, %s47
    %s64 = sphi 0, %s48
    %s74 = sphi 0, %s76
    %s77 = sphi 0, %s74
    %s78 = sphi 0, %s77
    %s94 = sphi 0, %s78
    %s102 = sphi 0, %s104
    %s105 = sphi 0, %s102
    %s106 = sphi 0, %s105
    %s122 = sphi 0, %s106
    %s130 = sphi 0, %s132
    %s133 = sphi 0, %s130
    %s134 = sphi 0, %s133
    %s150 = sphi 0, %s134
    %s158 = sphi 0, %s160
    %s161 = sphi 0, %s158
    %s162 = sphi 0, %s161
    %s178 = sphi 0, %s162
  $region4: #{generalized_dice_loss.1} parent=0 // loop_header_branch
    %14 = sbr.rel (%p12) target = $region8
  $region5: #{generalized_dice_loss.1} parent=0 // loop_body
    %s16 = ssub.s32 %s11, 1
    %s17 = ssub.s32 %s11, 2
    %s27 = sadd.s32 1, %s20
    %p28 = scmp.ge.s32.totalorder %s27, 1
    %s29 = scalar_select %p28, 0, %s27
    %s30 = sadd.s32 1, %s19
    %s31 = scalar_select %p28, %s30, %s19
    %p32 = scmp.ge.s32.totalorder %s31, 2
    %s33 = scalar_select %p32, 0, %s31
    %s34 = sadd.s32 1, %s18
    %s35 = scalar_select %p32, %s34, %s18
    %p36 = scmp.ge.s32.totalorder %s35, 1
    %s37 = scalar_select %p36, 0, %s35
    %s38 = sadd.s32 %s18, %s20
    %s39 = sadd.s32 %s37, %s29
    %s40 = ssub.s32 %s19, %s33
    %s41 = ssub.s32 %s38, %s39
    %s42 = sor.u32 %s40, %s41
    %p43 = scmp.eq.s32.totalorder %s42, 0
    %s45 = sadd.s32 %s44, 1
    %s46 = scalar_select %p43, %s44, %s45
    %p49 = pneg %p43
    %p50 = scmp.eq.s32.totalorder %s11, 1
    %p51 = por %p49, %p50
    %p52 = scmp.ne.s32.totalorder %s44, %s47
    %p53 = scmp.eq.s32.totalorder %s11, 0
    %p54 = por %p52, %p53
    %p55 = scmp.ne.s32.totalorder %s44, %s47
    %p56 = scmp.eq.s32.totalorder %s16, 1
    %p57 = por %p55, %p56
    %p58 = scmp.ne.s32.totalorder %s47, %s48
    %p59 = scmp.eq.s32.totalorder %s16, 0
    %p60 = por %p58, %p59
    %p61 = scmp.ne.s32.totalorder %s47, %s48
    %p62 = scmp.eq.s32.totalorder %s17, 1
    %p63 = por %p61, %p62
    %p65 = scmp.ne.s32.totalorder %s48, %s64
    %p66 = scmp.eq.s32.totalorder %s17, 0
    %p67 = por %p65, %p66
    %s68 = sadd.s32 %s18, %s20
    %s69 = sadd.s32 %s37, %s29
    %s70 = ssub.s32 %s19, %s33
    %s71 = ssub.s32 %s68, %s69
    %s72 = sor.u32 %s70, %s71
    %p73 = scmp.eq.s32.totalorder %s72, 0
    %s75 = sadd.s32 %s74, 1
    %s76 = scalar_select %p73, %s74, %s75
    %p79 = pneg %p73
    %p80 = scmp.eq.s32.totalorder %s11, 1
    %p81 = por %p79, %p80
    %p82 = scmp.ne.s32.totalorder %s74, %s77
    %p83 = scmp.eq.s32.totalorder %s11, 0
    %p84 = por %p82, %p83
    %p85 = scmp.ne.s32.totalorder %s74, %s77
    %p86 = scmp.eq.s32.totalorder %s16, 1
    %p87 = por %p85, %p86
    %p88 = scmp.ne.s32.totalorder %s77, %s78
    %p89 = scmp.eq.s32.totalorder %s16, 0
    %p90 = por %p88, %p89
    %p91 = scmp.ne.s32.totalorder %s77, %s78
    %p92 = scmp.eq.s32.totalorder %s17, 1
    %p93 = por %p91, %p92
    %p95 = scmp.ne.s32.totalorder %s78, %s94
    %p96 = scmp.eq.s32.totalorder %s17, 0
    %p97 = por %p95, %p96
    %s98 = ssub.s32 %s18, %s37
    %s99 = ssub.s32 %s19, %s33
    %s100 = sor.u32 %s98, %s99
    %p101 = scmp.eq.s32.totalorder %s100, 0
    %s103 = sadd.s32 %s102, 1
    %s104 = scalar_select %p101, %s102, %s103
    %p107 = pneg %p101
    %p108 = scmp.eq.s32.totalorder %s11, 1
    %p109 = por %p107, %p108
    %p110 = scmp.ne.s32.totalorder %s102, %s105
    %p111 = scmp.eq.s32.totalorder %s11, 0
    %p112 = por %p110, %p111
    %p113 = scmp.ne.s32.totalorder %s102, %s105
    %p114 = scmp.eq.s32.totalorder %s16, 1
    %p115 = por %p113, %p114
    %p116 = scmp.ne.s32.totalorder %s105, %s106
    %p117 = scmp.eq.s32.totalorder %s16, 0
    %p118 = por %p116, %p117
    %p119 = scmp.ne.s32.totalorder %s105, %s106
    %p120 = scmp.eq.s32.totalorder %s17, 1
    %p121 = por %p119, %p120
    %p123 = scmp.ne.s32.totalorder %s106, %s122
    %p124 = scmp.eq.s32.totalorder %s17, 0
    %p125 = por %p123, %p124
    %s126 = ssub.s32 %s18, %s37
    %s127 = ssub.s32 %s19, %s33
    %s128 = sor.u32 %s126, %s127
    %p129 = scmp.eq.s32.totalorder %s128, 0
    %s131 = sadd.s32 %s130, 1
    %s132 = scalar_select %p129, %s130, %s131
    %p135 = pneg %p129
    %p136 = scmp.eq.s32.totalorder %s11, 1
    %p137 = por %p135, %p136
    %p138 = scmp.ne.s32.totalorder %s130, %s133
    %p139 = scmp.eq.s32.totalorder %s11, 0
    %p140 = por %p138, %p139
    %p141 = scmp.ne.s32.totalorder %s130, %s133
    %p142 = scmp.eq.s32.totalorder %s16, 1
    %p143 = por %p141, %p142
    %p144 = scmp.ne.s32.totalorder %s133, %s134
    %p145 = scmp.eq.s32.totalorder %s16, 0
    %p146 = por %p144, %p145
    %p147 = scmp.ne.s32.totalorder %s133, %s134
    %p148 = scmp.eq.s32.totalorder %s17, 1
    %p149 = por %p147, %p148
    %p151 = scmp.ne.s32.totalorder %s134, %s150
    %p152 = scmp.eq.s32.totalorder %s17, 0
    %p153 = por %p151, %p152
    %s154 = ssub.s32 %s18, %s37
    %s155 = ssub.s32 %s19, %s33
    %s156 = sor.u32 %s154, %s155
    %p157 = scmp.eq.s32.totalorder %s156, 0
    %s159 = sadd.s32 %s158, 1
    %s160 = scalar_select %p157, %s158, %s159
    %p163 = pneg %p157
    %p164 = scmp.eq.s32.totalorder %s11, 1
    %p165 = por %p163, %p164
    %p166 = scmp.ne.s32.totalorder %s158, %s161
    %p167 = scmp.eq.s32.totalorder %s11, 0
    %p168 = por %p166, %p167
    %p169 = scmp.ne.s32.totalorder %s158, %s161
    %p170 = scmp.eq.s32.totalorder %s16, 1
    %p171 = por %p169, %p170
    %p172 = scmp.ne.s32.totalorder %s161, %s162
    %p173 = scmp.eq.s32.totalorder %s16, 0
    %p174 = por %p172, %p173
    %p175 = scmp.ne.s32.totalorder %s161, %s162
    %p176 = scmp.eq.s32.totalorder %s17, 1
    %p177 = por %p175, %p176
    %p179 = scmp.ne.s32.totalorder %s162, %s178
    %p180 = scmp.eq.s32.totalorder %s17, 0
    %p181 = por %p179, %p180
    %p182 = scmp.le.s32.totalorder 1, %s11
    %p183 = scmp.lt.s32.totalorder %s11, 3
    %p184 = pnand %p182, %p183
    %p185 = pneg %p184
    // Predicated region
    $region9: #{generalized_dice_loss.1} parent=5 // pred_check
      _
    $region10: #{generalized_dice_loss.1} parent=5 // pred_check_branch
      %187 = sbr.rel (%p184) target = $region12
    $region11: #{generalized_dice_loss.1} parent=5 // pred_region
      %s188 = ssub.s32 %s11, 1
    $region12: #{generalized_dice_loss.1} parent=5 // pred_fallthru
      _
    %p189 = scmp.lt.s32.totalorder %s11, 2
    // Predicated region
    $region13: #{generalized_dice_loss.1} parent=5 // pred_check
      %p190 = pneg %p189
    $region14: #{generalized_dice_loss.1} parent=5 // pred_check_branch
      %192 = sbr.rel (%p190) target = $region16
    $region15: #{generalized_dice_loss.1} parent=5 // pred_region
      // Predicated region
      $region17: #{generalized_dice_loss.1} parent=15 // pred_check
        %p193 = pneg %p54
      $region18: #{generalized_dice_loss.1} parent=15 // pred_check_branch
        %195 = sbr.rel (%p193) target = $region20
      $region19: #{generalized_dice_loss.1} parent=15 // pred_region
        %s196 = sadd.s32 %s18, %s20
        %p197 = scmp.lt.s32.totalorder %s19, 1
        %s198 = scalar_select %p197, %s19, 1
        %p199 = scmp.lt.s32.totalorder %s196, 0
        %s200 = scalar_select %p199, %s196, 0
        %s201 = smul.addr %s198, 4
        %s202 = sadd.s32 %s200, %s201
        %s203 = smul.addr %s202, 2
        %s204 = scalar_lea.vmem %s0, %s203
        %s205 = sadd.s32 %s18, %s20
      $region20: #{generalized_dice_loss.1} parent=15 // pred_fallthru
        _
      // Predicated region
      $region21: #{generalized_dice_loss.1} parent=15 // pred_check
        %p206 = pneg %p84
      $region22: #{generalized_dice_loss.1} parent=15 // pred_check_branch
        %208 = sbr.rel (%p206) target = $region24
      $region23: #{generalized_dice_loss.1} parent=15 // pred_region
        %s209 = sadd.s32 %s18, %s20
        %p210 = scmp.lt.s32.totalorder %s19, 1
        %s211 = scalar_select %p210, %s19, 1
        %p212 = scmp.lt.s32.totalorder %s209, 0
        %s213 = scalar_select %p212, %s209, 0
        %s214 = smul.addr %s211, 4
        %s215 = sadd.s32 %s213, %s214
        %s216 = smul.addr %s215, 2
        %s217 = scalar_lea.vmem %s1, %s216
        %s218 = sadd.s32 %s18, %s20
      $region24: #{generalized_dice_loss.1} parent=15 // pred_fallthru
        _
    $region16: #{generalized_dice_loss.1} parent=5 // pred_fallthru
      _
    %p219 = scmp.le.s32.totalorder 1, %s11
    %p220 = scmp.lt.s32.totalorder %s11, 3
    %p221 = pnand %p219, %p220
    %p222 = pneg %p221
    // Predicated region
    $region25: #{generalized_dice_loss.1} parent=5 // pred_check
      _
    $region26: #{generalized_dice_loss.1} parent=5 // pred_check_branch
      %224 = sbr.rel (%p221) target = $region28
    $region27: #{generalized_dice_loss.1} parent=5 // pred_region
      %s225 = ssub.s32 %s11, 1
      %s226 = sadd.s32 %s21, %s23
      %p227 = scmp.lt.s32.totalorder %s22, 1
      %s228 = scalar_select %p227, %s22, 1
      %p229 = scmp.lt.s32.totalorder %s226, 0
      %s230 = scalar_select %p229, %s226, 0
      %s231 = smul.addr %s228, 4
      %s232 = sadd.s32 %s230, %s231
      %s233 = smul.addr %s232, 2
      %s234 = scalar_lea.vmem %s0, %s233
      %p235 = pneg %p60
      %p236 = pneg %p57
      %s237 = sadd.s32 %s21, %s23
      %p238 = scmp.lt.s32.totalorder %s22, 1
      %s239 = scalar_select %p238, %s22, 1
      %p240 = scmp.lt.s32.totalorder %s237, 0
      %s241 = scalar_select %p240, %s237, 0
      %s242 = smul.addr %s239, 4
      %s243 = sadd.s32 %s241, %s242
      %s244 = smul.addr %s243, 2
      %s245 = scalar_lea.vmem %s1, %s244
      %p246 = pneg %p90
      %p247 = pneg %p87
      %p248 = pneg %p118
      %p249 = pneg %p115
      %p250 = scmp.lt.s32.totalorder %s21, 0
      %s251 = scalar_select %p250, %s21, 0
      %p252 = scmp.lt.s32.totalorder %s22, 1
      %s253 = scalar_select %p252, %s22, 1
      %s254 = smul.addr %s251, 2
      %s255 = sadd.s32 %s253, %s254
      %s256 = smul.addr %s255, 4
      %s257 = scalar_lea.vmem %s2, %s256
      %p258 = pneg %p146
      %p259 = pneg %p143
      %p260 = scmp.lt.s32.totalorder %s21, 0
      %s261 = scalar_select %p260, %s21, 0
      %p262 = scmp.lt.s32.totalorder %s22, 1
      %s263 = scalar_select %p262, %s22, 1
      %s264 = smul.addr %s261, 2
      %s265 = sadd.s32 %s263, %s264
      %s266 = smul.addr %s265, 4
      %s267 = scalar_lea.vmem %s3, %s266
      %p268 = pneg %p174
      %p269 = pneg %p171
      %p270 = scmp.lt.s32.totalorder %s21, 0
      %s271 = scalar_select %p270, %s21, 0
      %p272 = scmp.lt.s32.totalorder %s22, 1
      %s273 = scalar_select %p272, %s22, 1
      %s274 = smul.addr %s271, 2
      %s275 = sadd.s32 %s273, %s274
      %s276 = smul.addr %s275, 4
      %s277 = scalar_lea.vmem %s4, %s276
      %s278 = sadd.s32 %s21, %s23
      %p279 = scmp.lt.s32.totalorder %s22, 1
      %s280 = scalar_select %p279, %s22, 1
      %p281 = scmp.lt.s32.totalorder %s278, 0
      %s282 = scalar_select %p281, %s278, 0
      %s283 = smul.addr %s280, 4
      %s284 = sadd.s32 %s282, %s283
      %s285 = smul.addr %s284, 2
      %s286 = scalar_lea.vmem %s0, %s285
      %s287 = sadd.s32 %s21, %s23
      %s288 = sadd.s32 %s21, %s23
      %p289 = scmp.lt.s32.totalorder %s22, 1
      %s290 = scalar_select %p289, %s22, 1
      %p291 = scmp.lt.s32.totalorder %s288, 0
      %s292 = scalar_select %p291, %s288, 0
      %s293 = smul.addr %s290, 4
      %s294 = sadd.s32 %s292, %s293
      %s295 = smul.addr %s294, 2
      %s296 = scalar_lea.vmem %s1, %s295
      %s297 = sadd.s32 %s21, %s23
      %p298 = scmp.lt.s32.totalorder %s21, 0
      %s299 = scalar_select %p298, %s21, 0
      %p300 = scmp.lt.s32.totalorder %s22, 1
      %s301 = scalar_select %p300, %s22, 1
      %s302 = smul.addr %s299, 2
      %s303 = sadd.s32 %s301, %s302
      %s304 = smul.addr %s303, 4
      %s305 = scalar_lea.vmem %s2, %s304
      %p306 = scmp.lt.s32.totalorder %s21, 0
      %s307 = scalar_select %p306, %s21, 0
      %p308 = scmp.lt.s32.totalorder %s22, 1
      %s309 = scalar_select %p308, %s22, 1
      %s310 = smul.addr %s307, 2
      %s311 = sadd.s32 %s309, %s310
      %s312 = smul.addr %s311, 4
      %s313 = scalar_lea.vmem %s3, %s312
      %p314 = scmp.lt.s32.totalorder %s21, 0
      %s315 = scalar_select %p314, %s21, 0
      %p316 = scmp.lt.s32.totalorder %s22, 1
      %s317 = scalar_select %p316, %s22, 1
      %s318 = smul.addr %s315, 2
      %s319 = sadd.s32 %s317, %s318
      %s320 = smul.addr %s319, 4
      %s321 = scalar_lea.vmem %s4, %s320
      %p322 = scmp.eq.s32.totalorder %s23, 0
      // Predicated region
      $region29: #{generalized_dice_loss.1} parent=27 // pred_check
        %p323 = pneg %p322
      $region30: #{generalized_dice_loss.1} parent=27 // pred_check_branch
        %325 = sbr.rel (%p323) target = $region32
      $region31: #{generalized_dice_loss.1} parent=27 // pred_region
        %326 = vst [vmem:[%s305] sm:$0xf] 0.0
        %327 = vst [vmem:[%s313] sm:$0xf] 0.0
        %328 = vst [vmem:[%s321] sm:$0xf] 0.0
      $region32: #{generalized_dice_loss.1} parent=27 // pred_fallthru
        _
      %v329 = vld [vmem:[%s286] sm:$0x3]
      %v330 = vld [vmem:[%s286 + $0x2] sm:$0x3]
      %v331 = vld [vmem:[%s286 + $0x4] sm:$0x3]
      %v332 = vld [vmem:[%s286 + $0x6] sm:$0x3]
      %v333 = vmul.f32 %v329, 0.5
      %v334 = vmul.f32 %v330, 0.5
      %v335 = vmul.f32 %v331, 0.5
      %v336 = vmul.f32 %v332, 0.5
      %v337 = vtanh.pop %v333
      %v338 = vtanh.pop %v334
      %v339 = vtanh.pop %v335
      %v340 = vtanh.pop %v336
      %v341 = vld [vmem:[%s296] sm:$0x3]
      %v342 = vld [vmem:[%s296 + $0x2] sm:$0x3]
      %v343 = vld [vmem:[%s296 + $0x4] sm:$0x3]
      %v344 = vld [vmem:[%s296 + $0x6] sm:$0x3]
      %v345 = vld [vmem:[%s305] sm:$0xf]
      %vm346 = vcmask 1041408
      %v347 = vsel %vm346, %v341, 0.0
      %v348 = vrot.slane %v347, 4
      %v349 = vadd.f32 %v347, %v348
      %v350 = vrot.slane %v349, 2
      %v351 = vadd.f32 %v349, %v350
      %v352 = vrot.slane %v351, 1
      %v353 = vadd.f32 %v351, %v352
      %v354 = vsel %vm346, %v342, 0.0
      %v355 = vrot.slane %v354, 4
      %v356 = vadd.f32 %v354, %v355
      %v357 = vrot.slane %v356, 2
      %v358 = vadd.f32 %v356, %v357
      %v359 = vrot.slane %v358, 1
      %v360 = vadd.f32 %v358, %v359
      %v361 = vsel %vm346, %v343, 0.0
      %v362 = vrot.slane %v361, 4
      %v363 = vadd.f32 %v361, %v362
      %v364 = vrot.slane %v363, 2
      %v365 = vadd.f32 %v363, %v364
      %v366 = vrot.slane %v365, 1
      %v367 = vadd.f32 %v365, %v366
      %v368 = vsel %vm346, %v344, 0.0
      %v369 = vrot.slane %v368, 4
      %v370 = vadd.f32 %v368, %v369
      %v371 = vrot.slane %v370, 2
      %v372 = vadd.f32 %v370, %v371
      %v373 = vrot.slane %v372, 1
      %v374 = vadd.f32 %v372, %v373
      %vm379 = vcmask 1041409
      %v380 = vsel %vm379, %v360, %v353
      %vm381 = vcmask 1042434
      %v382 = vsel %vm381, %v367, %v380
      %vm383 = vcmask 1043459
      %v384 = vsel %vm383, %v374, %v382
      %v386 = vadd.f32 %v345, %v384
      %387 = vst [vmem:[%s305] sm:$0xf] %v386
      %v388 = vld [vmem:[%s313] sm:$0xf]
      %v389 = vsel %vm346, %v337, 0.0
      %v390 = vrot.slane %v389, 4
      %v391 = vadd.f32 %v389, %v390
      %v392 = vrot.slane %v391, 2
      %v393 = vadd.f32 %v391, %v392
      %v394 = vrot.slane %v393, 1
      %v395 = vadd.f32 %v393, %v394
      %v396 = vsel %vm346, %v338, 0.0
      %v397 = vrot.slane %v396, 4
      %v398 = vadd.f32 %v396, %v397
      %v399 = vrot.slane %v398, 2
      %v400 = vadd.f32 %v398, %v399
      %v401 = vrot.slane %v400, 1
      %v402 = vadd.f32 %v400, %v401
      %v403 = vsel %vm346, %v339, 0.0
      %v404 = vrot.slane %v403, 4
      %v405 = vadd.f32 %v403, %v404
      %v406 = vrot.slane %v405, 2
      %v407 = vadd.f32 %v405, %v406
      %v408 = vrot.slane %v407, 1
      %v409 = vadd.f32 %v407, %v408
      %v410 = vsel %vm346, %v340, 0.0
      %v411 = vrot.slane %v410, 4
      %v412 = vadd.f32 %v410, %v411
      %v413 = vrot.slane %v412, 2
      %v414 = vadd.f32 %v412, %v413
      %v415 = vrot.slane %v414, 1
      %v416 = vadd.f32 %v414, %v415
      %v421 = vsel %vm379, %v402, %v395
      %v422 = vsel %vm381, %v409, %v421
      %v423 = vsel %vm383, %v416, %v422
      %v425 = vadd.f32 %v388, %v423
      %426 = vst [vmem:[%s313] sm:$0xf] %v425
      %v427 = vld [vmem:[%s321] sm:$0xf]
      %v428 = vmul.f32 %v337, %v341
      %v429 = vmul.f32 %v338, %v342
      %v430 = vmul.f32 %v339, %v343
      %v431 = vmul.f32 %v340, %v344
      %v432 = vsel %vm346, %v428, 0.0
      %v433 = vrot.slane %v432, 4
      %v434 = vadd.f32 %v432, %v433
      %v435 = vrot.slane %v434, 2
      %v436 = vadd.f32 %v434, %v435
      %v437 = vrot.slane %v436, 1
      %v438 = vadd.f32 %v436, %v437
      %v439 = vsel %vm346, %v429, 0.0
      %v440 = vrot.slane %v439, 4
      %v441 = vadd.f32 %v439, %v440
      %v442 = vrot.slane %v441, 2
      %v443 = vadd.f32 %v441, %v442
      %v444 = vrot.slane %v443, 1
      %v445 = vadd.f32 %v443, %v444
      %v446 = vsel %vm346, %v430, 0.0
      %v447 = vrot.slane %v446, 4
      %v448 = vadd.f32 %v446, %v447
      %v449 = vrot.slane %v448, 2
      %v450 = vadd.f32 %v448, %v449
      %v451 = vrot.slane %v450, 1
      %v452 = vadd.f32 %v450, %v451
      %v453 = vsel %vm346, %v431, 0.0
      %v454 = vrot.slane %v453, 4
      %v455 = vadd.f32 %v453, %v454
      %v456 = vrot.slane %v455, 2
      %v457 = vadd.f32 %v455, %v456
      %v458 = vrot.slane %v457, 1
      %v459 = vadd.f32 %v457, %v458
      %v464 = vsel %vm379, %v445, %v438
      %v465 = vsel %vm381, %v452, %v464
      %v466 = vsel %vm383, %v459, %v465
      %v468 = vadd.f32 %v427, %v466
      %469 = vst [vmem:[%s321] sm:$0xf] %v468
      %p470 = scmp.lt.s32.totalorder %s21, 0
      %s471 = scalar_select %p470, %s21, 0
      %p472 = scmp.lt.s32.totalorder %s22, 1
      %s473 = scalar_select %p472, %s22, 1
      %s474 = smul.addr %s471, 2
      %s475 = sadd.s32 %s473, %s474
      %s476 = smul.addr %s475, 4
      %s477 = scalar_lea.vmem %s2, %s476
      %p478 = scmp.lt.s32.totalorder %s21, 0
      %s479 = scalar_select %p478, %s21, 0
      %p480 = scmp.lt.s32.totalorder %s22, 1
      %s481 = scalar_select %p480, %s22, 1
      %s482 = smul.addr %s479, 2
      %s483 = sadd.s32 %s481, %s482
      %s484 = smul.addr %s483, 4
      %s485 = scalar_lea.vmem %s3, %s484
      %p486 = scmp.lt.s32.totalorder %s21, 0
      %s487 = scalar_select %p486, %s21, 0
      %p488 = scmp.lt.s32.totalorder %s22, 1
      %s489 = scalar_select %p488, %s22, 1
      %s490 = smul.addr %s487, 2
      %s491 = sadd.s32 %s489, %s490
      %s492 = smul.addr %s491, 4
      %s493 = scalar_lea.vmem %s4, %s492
      // Predicated region
      $region33: #{generalized_dice_loss.1} parent=27 // pred_check
        %p494 = pneg %p115
      $region34: #{generalized_dice_loss.1} parent=27 // pred_check_branch
        %496 = sbr.rel (%p494) target = $region36
      $region35: #{generalized_dice_loss.1} parent=27 // pred_region
        _
      $region36: #{generalized_dice_loss.1} parent=27 // pred_fallthru
        _
      // Predicated region
      $region37: #{generalized_dice_loss.1} parent=27 // pred_check
        %p497 = pneg %p143
      $region38: #{generalized_dice_loss.1} parent=27 // pred_check_branch
        %499 = sbr.rel (%p497) target = $region40
      $region39: #{generalized_dice_loss.1} parent=27 // pred_region
        _
      $region40: #{generalized_dice_loss.1} parent=27 // pred_fallthru
        _
      // Predicated region
      $region41: #{generalized_dice_loss.1} parent=27 // pred_check
        %p500 = pneg %p171
      $region42: #{generalized_dice_loss.1} parent=27 // pred_check_branch
        %502 = sbr.rel (%p500) target = $region44
      $region43: #{generalized_dice_loss.1} parent=27 // pred_region
        _
      $region44: #{generalized_dice_loss.1} parent=27 // pred_fallthru
        _
    $region28: #{generalized_dice_loss.1} parent=5 // pred_fallthru
      _
    %p503 = scmp.le.s32.totalorder 2, %s11
    // Predicated region
    $region45: #{generalized_dice_loss.1} parent=5 // pred_check
      %p504 = pneg %p503
    $region46: #{generalized_dice_loss.1} parent=5 // pred_check_branch
      %506 = sbr.rel (%p504) target = $region48
    $region47: #{generalized_dice_loss.1} parent=5 // pred_region
      %s507 = ssub.s32 %s11, 2
      // Predicated region
      $region49: #{generalized_dice_loss.1} parent=47 // pred_check
        %p508 = pneg %p121
      $region50: #{generalized_dice_loss.1} parent=47 // pred_check_branch
        %510 = sbr.rel (%p508) target = $region52
      $region51: #{generalized_dice_loss.1} parent=47 // pred_region
        %p511 = scmp.lt.s32.totalorder %s24, 0
        %s512 = scalar_select %p511, %s24, 0
        %p513 = scmp.lt.s32.totalorder %s25, 1
        %s514 = scalar_select %p513, %s25, 1
        %s515 = smul.addr %s512, 2
        %s516 = sadd.s32 %s514, %s515
        %s517 = smul.addr %s516, 4
        %s518 = scalar_lea.vmem %s2, %s517
      $region52: #{generalized_dice_loss.1} parent=47 // pred_fallthru
        _
      // Predicated region
      $region53: #{generalized_dice_loss.1} parent=47 // pred_check
        %p519 = pneg %p149
      $region54: #{generalized_dice_loss.1} parent=47 // pred_check_branch
        %521 = sbr.rel (%p519) target = $region56
      $region55: #{generalized_dice_loss.1} parent=47 // pred_region
        %p522 = scmp.lt.s32.totalorder %s24, 0
        %s523 = scalar_select %p522, %s24, 0
        %p524 = scmp.lt.s32.totalorder %s25, 1
        %s525 = scalar_select %p524, %s25, 1
        %s526 = smul.addr %s523, 2
        %s527 = sadd.s32 %s525, %s526
        %s528 = smul.addr %s527, 4
        %s529 = scalar_lea.vmem %s3, %s528
      $region56: #{generalized_dice_loss.1} parent=47 // pred_fallthru
        _
      // Predicated region
      $region57: #{generalized_dice_loss.1} parent=47 // pred_check
        %p530 = pneg %p177
      $region58: #{generalized_dice_loss.1} parent=47 // pred_check_branch
        %532 = sbr.rel (%p530) target = $region60
      $region59: #{generalized_dice_loss.1} parent=47 // pred_region
        %p533 = scmp.lt.s32.totalorder %s24, 0
        %s534 = scalar_select %p533, %s24, 0
        %p535 = scmp.lt.s32.totalorder %s25, 1
        %s536 = scalar_select %p535, %s25, 1
        %s537 = smul.addr %s534, 2
        %s538 = sadd.s32 %s536, %s537
        %s539 = smul.addr %s538, 4
        %s540 = scalar_lea.vmem %s4, %s539
      $region60: #{generalized_dice_loss.1} parent=47 // pred_fallthru
        _
    $region48: #{generalized_dice_loss.1} parent=5 // pred_fallthru
      _
  $region6: #{generalized_dice_loss.1} parent=0 // loop_footer
    %s15 = sadd.s32 1, %s11
  $region7: #{generalized_dice_loss.1} parent=0 // loop_footer_branch
    %10 = sbr.rel target = $region3
  $region8: #{generalized_dice_loss.1} parent=0 // loop_exit
    _

</llo_original>
